<compile_context>
chip_gen: v7x
topology: tpu7x:2x2x1
jax: 0.10.0
libtpu: 0.0.40
codegen_flags: <defaults>
</compile_context>

<pallas_src>
import math

import jax
import jax.numpy as jnp
import numpy as np
from jax.experimental import pallas as pl
from jax.experimental.pallas import tpu as pltpu

flatten = lambda l: [item for sub in l for item in sub]


# ----------------------------- small helpers -----------------------------

def _round_up(x, m):
    return ((x + m - 1) // m) * m


def _vmem_limit_bytes():
    """Generation-aware scoped-VMEM limit: ~100 MiB on 128-MiB parts (v5e/v6e), 48 MiB otherwise."""
    limit = 48 * 1024 * 1024          # safe everywhere (fits v7x's 64 MiB physical VMEM)
    try:
        cap = int(pltpu.get_tpu_info().vmem_capacity_bytes)
        if cap >= 96 * 1024 * 1024:   # v5e / v6e: 128 MiB physical
            limit = 100 * 1024 * 1024
    except Exception:
        pass
    return limit


_VMEM_LIMIT = _vmem_limit_bytes()


# ----------------------------- graph utilities (host side) -----------------------------

def el2rel(triples, n):
    assert max(s for s, _, _ in triples) <= n
    assert max(o for _, _, o in triples) <= n
    res = {s: [] for s in range(n)}
    for s, p, o in triples:
        res[s].append((s, p, o))
    return res


def invert_graph(graph, n):
    assert max(graph.keys()) <= n
    res = {s: [] for s in range(n)}
    for _, edges in graph.items():
        for s, p, o in edges:
            res[o].append((s, p, o))
    return res


class Batch:
    """Port of kgmodels.simple.Batch (pure python bookkeeping)."""

    def __init__(self, triples, graph, inv_graph):
        self.triples = [tuple(t) for t in triples]
        self.entities = [set([s, o]) for s, _, o in self.triples]
        self.edgesets = [set() for _ in self.triples]
        self.graph = graph
        self.inv_graph = inv_graph

    def entities_stable(self):
        return [sorted(list(nodes)) for nodes in self.entities]

    def size(self):
        return len(self.entities)

    def num_nodes(self):
        return sum(len(e) for e in self.entities)

    def gen_inc_edges(self, bi, rm_duplicates=True, rm_seed=True):
        seen = set()
        for node in self.entities[bi]:
            for edge in self.graph[node]:
                if edge not in self.edgesets[bi]:
                    if not rm_duplicates or edge not in seen:
                        if not rm_seed or edge != self.triples[bi]:
                            yield edge
                            if rm_duplicates:
                                seen.add(edge)
            for edge in self.inv_graph[node]:
                if edge not in self.edgesets[bi]:
                    if edge[0] != edge[2]:
                        if not rm_duplicates or edge not in seen:
                            if not rm_seed or edge != self.triples[bi]:
                                yield edge
                                if rm_duplicates:
                                    seen.add(edge)

    def add_edges(self, edges, bi):
        for s, _, o in edges:
            self.entities[bi].add(s)
            self.entities[bi].add(o)
        self.edgesets[bi].update(edges)

    def indices(self):
        return [e for e in self.entities_stable()]

    def edges(self):
        for bi in range(self.size()):
            for edge in self.edgesets[bi]:
                yield edge

    def batch_triples(self):
        b2d = flatten(self.indices())
        d2b = {di: bi for bi, di in enumerate(b2d)}
        return [(d2b[s], p, d2b[o]) for s, p, o in self.edges()]

    def target_indices(self, indices):
        relative = []
        for i, (s, _, o) in enumerate(self.triples):
            relative.append((indices[i].index(s), indices[i].index(o)))
        absolute = []
        count = 0
        for i, (s, o) in enumerate(relative):
            absolute.append((s + count, o + count))
            count += len(indices[i])
        return relative, absolute


# ----------------------------- Pallas kernels -----------------------------

def _triple_score_kernel(s_ref, p_ref, o_ref, wkt_ref, bk_ref, wqt_ref, bq_ref, out_ref):
    # k = s @ Wk^T + bk ; q = o @ Wq^T + bq ; dots = sum(k * p * q, axis=-1)
    # bf16 MXU operands, f32 accumulation / elementwise.
    k = jnp.dot(s_ref[...], wkt_ref[...], preferred_element_type=jnp.float32) + bk_ref[...]
    q = jnp.dot(o_ref[...], wqt_ref[...], preferred_element_type=jnp.float32) + bq_ref[...]
    p = p_ref[...].astype(jnp.float32)
    out_ref[...] = jnp.sum(k * p * q, axis=-1, keepdims=True)


def triple_score(semb, pemb, oemb, wkt_bf16, bk_row, wqt_bf16, bq_row, *, max_tile=1024):
    """Distmult attention dots with key/query projections. Returns shape (E,), f32.

    Tiled over E ("parallel" grid axis); s/p/o/W operands fed to the MXU as bf16.
    """
    e, emb = semb.shape
    tile = min(max_tile, _round_up(e, 16))   # 16-row granularity keeps bf16 sublane tiles full
    e_pad = _round_up(e, tile)

    sb = semb.astype(jnp.bfloat16)
    pb = pemb.astype(jnp.bfloat16)
    ob = oemb.astype(jnp.bfloat16)
    if e_pad != e:
        pad = ((0, e_pad - e), (0, 0))
        sb, pb, ob = (jnp.pad(x, pad) for x in (sb, pb, ob))

    out = pl.pallas_call(
        _triple_score_kernel,
        out_shape=jax.ShapeDtypeStruct((e_pad, 1), jnp.float32),
        grid=(e_pad // tile,),
        in_specs=[
            pl.BlockSpec((tile, emb), lambda i: (i, 0)),
            pl.BlockSpec((tile, emb), lambda i: (i, 0)),
            pl.BlockSpec((tile, emb), lambda i: (i, 0)),
            pl.BlockSpec((emb, emb), lambda i: (0, 0)),
            pl.BlockSpec((1, emb), lambda i: (0, 0)),
            pl.BlockSpec((emb, emb), lambda i: (0, 0)),
            pl.BlockSpec((1, emb), lambda i: (0, 0)),
        ],
        out_specs=pl.BlockSpec((tile, 1), lambda i: (i, 0)),
        compiler_params=pltpu.CompilerParams(
            dimension_semantics=("parallel",),
            vmem_limit_bytes=_VMEM_LIMIT),
    )(sb, pb, ob, wkt_bf16, bk_row, wqt_bf16, bq_row)
    return out[:e, 0]


def _rgcn_kernel(counts_ref, adj_ref, nodes_ref, wt_ref, out_ref, acc_ref):
    tb = pl.program_id(0)
    rel = pl.program_id(1)

    @pl.when(rel == 0)
    def _init():
        acc_ref[...] = jnp.zeros_like(acc_ref)

    # Skip all-zero adjacency tiles entirely (densified sparse graph -> most tiles are empty).
    @pl.when(counts_ref[tb, rel] > 0)
    def _compute():
        # message passing for this relation / row tile: (TB, bn_pad) @ (bn_pad, emb)
        msg = jnp.dot(adj_ref[0], nodes_ref[...], preferred_element_type=jnp.float32)
        # per-relation mixing: msg @ W_r^T (W pre-transposed in the wrapper), bf16 on the MXU
        acc_ref[...] += jnp.dot(msg.astype(jnp.bfloat16), wt_ref[0],
                                preferred_element_type=jnp.float32)

    @pl.when(rel == pl.num_programs(1) - 1)
    def _finalize():
        out_ref[...] = jnp.maximum(acc_ref[...], 0.0)   # ReLU


def rgcn_layer(adj, nodes, wt_bf16, counts, *, row_tile):
    """relu( sum_r (adj[r] @ nodes) @ W_r^T ).

    adj:(r, bn_pad, bn_pad)  nodes:(bn_pad, emb) f32  wt_bf16:(r, emb, emb) pre-transposed bf16
    counts:(bn_pad // row_tile, r) int32 -- nonzeros per (row-tile, relation), scalar-prefetched.
    Grid is (row-tiles "parallel", relations "arbitrary"); f32 accumulator, f32 output.
    """
    r, bn_pad, _ = adj.shape
    emb = nodes.shape[1]
    num_tb = bn_pad // row_tile

    adj_b = adj.astype(jnp.bfloat16)
    nodes_b = nodes.astype(jnp.bfloat16)

    def adj_map(tb, rel, cnt):
        # empty tile -> re-point at relation 0 so no new adjacency DMA is issued for it
        return (jnp.where(cnt[tb, rel] > 0, rel, 0), tb, 0)

    return pl.pallas_call(
        _rgcn_kernel,
        out_shape=jax.ShapeDtypeStruct((bn_pad, emb), jnp.float32),
        grid_spec=pltpu.PrefetchScalarGridSpec(
            num_scalar_prefetch=1,
            grid=(num_tb, r),
            in_specs=[
                pl.BlockSpec((1, row_tile, bn_pad), adj_map),
                pl.BlockSpec((bn_pad, emb), lambda tb, rel, cnt: (0, 0)),
                pl.BlockSpec((1, emb, emb), lambda tb, rel, cnt: (rel, 0, 0)),
            ],
            out_specs=pl.BlockSpec((row_tile, emb), lambda tb, rel, cnt: (tb, 0)),
            scratch_shapes=[pltpu.VMEM((row_tile, emb), jnp.float32)],
        ),
        compiler_params=pltpu.CompilerParams(
            dimension_semantics=("parallel", "arbitrary"),
            vmem_limit_bytes=_VMEM_LIMIT),
    )(counts, adj_b, nodes_b, wt_bf16)


def _distmult_kernel(s_ref, p_ref, o_ref, out_ref):
    out_ref[...] = jnp.sum(s_ref[...] * p_ref[...] * o_ref[...], axis=-1, keepdims=True)


def distmult_pallas(s, p, o, *, max_tile=1024):
    b, emb = s.shape
    tile = min(max_tile, _round_up(b, 8))
    b_pad = _round_up(b, tile)
    if b_pad != b:
        pad = ((0, b_pad - b), (0, 0))
        s, p, o = (jnp.pad(x, pad) for x in (s, p, o))
    out = pl.pallas_call(
        _distmult_kernel,
        out_shape=jax.ShapeDtypeStruct((b_pad, 1), jnp.float32),
        grid=(b_pad // tile,),
        in_specs=[pl.BlockSpec((tile, emb), lambda i: (i, 0))] * 3,
        out_specs=pl.BlockSpec((tile, 1), lambda i: (i, 0)),
        compiler_params=pltpu.CompilerParams(
            dimension_semantics=("parallel",),
            vmem_limit_bytes=_VMEM_LIMIT),
    )(s, p, o)
    return out[:b, 0]


def distmult(s, p, o):
    # For tiny query batches the pallas_call launch overhead dwarfs the work -> plain jnp.
    if s.shape[0] < 256:
        return jnp.sum(s * p * o, axis=-1)
    return distmult_pallas(s, p, o)


# ----------------------------- SimpleLP (JAX/Pallas) -----------------------------

class SimpleLPPallas:
    def __init__(self, triples, n, r, emb=128, ksample=50, seed=0):
        self.n, self.r, self.emb, self.ksample = n, r, emb, ksample
        self.graph = el2rel(triples, n)
        self.inv_graph = invert_graph(self.graph, n)

        key = jax.random.PRNGKey(seed)
        ks = jax.random.split(key, 8)

        def xavier(k, shape):
            fan_in, fan_out = shape[-1], shape[-2]
            bound = math.sqrt(2.0) * math.sqrt(6.0 / (fan_in + fan_out))  # relu gain
            return jax.random.uniform(k, shape, jnp.float32, -bound, bound)

        self.embeddings = jax.random.normal(ks[0], (n, emb), jnp.float32)
        self.relations = xavier(ks[1], (r, emb))
        lb = 1.0 / math.sqrt(emb)
        self.tokeys_w = jax.random.uniform(ks[2], (emb, emb), jnp.float32, -lb, lb)
        self.tokeys_b = jnp.zeros((emb,), jnp.float32)
        self.toqueries_w = jax.random.uniform(ks[3], (emb, emb), jnp.float32, -lb, lb)
        self.toqueries_b = jnp.zeros((emb,), jnp.float32)
        self.rgcn0_w = xavier(ks[4], (r, emb, emb))
        self.rgcn1_w = xavier(ks[5], (r, emb, emb))
        # present in the reference module but never used inside forward():
        self.gbias = jnp.zeros((1,), jnp.float32)
        self.sbias = jnp.zeros((n,), jnp.float32)
        self.pbias = jnp.zeros((r,), jnp.float32)
        self.obias = jnp.zeros((n,), jnp.float32)
        self._sample_key = ks[6]

        # Hoisted, kernel-ready parameter views (perf feedback): transposed once, bf16 for MXU.
        self.tokeys_wT = jnp.asarray(self.tokeys_w.T, dtype=jnp.bfloat16)
        self.toqueries_wT = jnp.asarray(self.toqueries_w.T, dtype=jnp.bfloat16)
        self.tokeys_b_row = self.tokeys_b.reshape(1, emb)
        self.toqueries_b_row = self.toqueries_b.reshape(1, emb)
        self.rgcn0_wT = jnp.transpose(self.rgcn0_w, (0, 2, 1)).astype(jnp.bfloat16)
        self.rgcn1_wT = jnp.transpose(self.rgcn1_w, (0, 2, 1)).astype(jnp.bfloat16)

    # ---- Sample module (csample=None path): attention-weighted edge sampling ----
    def _sample(self, batch, key):
        B = batch.size()
        cflats = [list(batch.gen_inc_edges(bi)) for bi in range(B)]
        lens = [len(x) for x in cflats]
        mx = max(lens)
        if mx == 0:
            return batch
        padded = [x + [(0, 0, 0)] * (mx - ln) for x, ln in zip(cflats, lens)]
        all_arr = jnp.asarray(padded, dtype=jnp.int32)                       # (B, mx, 3)
        semb = self.embeddings[all_arr[:, :, 0]].reshape(B * mx, self.emb)   # gathers: glue
        pemb = self.relations[all_arr[:, :, 1]].reshape(B * mx, self.emb)
        oemb = self.embeddings[all_arr[:, :, 2]].reshape(B * mx, self.emb)
        dots = triple_score(semb, pemb, oemb,
                            self.tokeys_wT, self.tokeys_b_row,
                            self.toqueries_wT, self.toqueries_b_row).reshape(B, mx)
        u = jax.random.uniform(key, (B, mx), jnp.float32)
        weights = jnp.log(u) / dots          # matches reference (u.log() / dots), incl. dots==0
        order = np.asarray(jnp.argsort(-weights, axis=1))                    # descending sort
        for bi in range(B):
            ind = [int(j) for j in order[bi] if int(j) < lens[bi]][: self.ksample]
            sampled = [padded[bi][j] for j in ind]
            batch.add_edges(sampled, bi)
        return batch

    def forward(self, triples, depth=2, key=None):
        triples = jnp.asarray(triples, dtype=jnp.int32)
        assert triples.shape[-1] == 3
        dims = triples.shape[:-1]
        triples = triples.reshape(-1, 3)
        trip_list = [tuple(int(v) for v in t) for t in np.asarray(triples).tolist()]

        batch = Batch(trip_list, self.graph, self.inv_graph)
        if key is None:
            key = self._sample_key
        k0, k1 = jax.random.split(key)
        if depth > 0:
            batch = self._sample(batch, k0)
        if depth > 1:
            batch = self._sample(batch, k1)

        bind = batch.indices()
        nodes = self.embeddings[jnp.asarray(flatten(bind), dtype=jnp.int32), :]

        if depth > 0:
            btr = np.asarray(batch.batch_triples(), dtype=np.int32)
            bn = batch.num_nodes()
            if btr.shape[0] > 0:
                bn_pad = _round_up(bn, 128)                     # unmasked vregs / full MXU tiles
                row_tile = 256 if bn_pad % 256 == 0 else 128
                num_tb = bn_pad // row_tile

                s_idx = jnp.asarray(btr[:, 0])
                p_idx = jnp.asarray(btr[:, 1])
                o_idx = jnp.asarray(btr[:, 2])
                # values = 1 / row-sum of the (r*bn, bn) sparse adjacency (util.sum_sparse)
                fr = s_idx + bn * p_idx
                rowsum = jnp.zeros((self.r * bn,), jnp.float32).at[fr].add(1.0)
                values = 1.0 / rowsum[fr]
                # densify the sparse spmm operand (padded) so the matmul runs on the MXU
                adj = jnp.zeros((self.r, bn_pad, bn_pad), jnp.float32
                                ).at[p_idx, s_idx, o_idx].add(values)
                # per-(row-tile, relation) nonzero counts -> lets the kernel skip empty tiles
                counts_np = np.zeros((num_tb, self.r), dtype=np.int32)
                np.add.at(counts_np, (btr[:, 0] // row_tile, btr[:, 1]), 1)
                counts = jnp.asarray(counts_np)

                nodes_pad = jnp.pad(nodes, ((0, bn_pad - bn), (0, 0))) if bn_pad != bn else nodes
                # NOTE: the reference forward also computes attention dots over dtriples here but
                # never uses them; skipped (dead code).
                nodes_pad = nodes_pad + rgcn_layer(adj, nodes_pad, self.rgcn0_wT,
                                                   counts, row_tile=row_tile)
                if depth > 1:
                    nodes_pad = nodes_pad + rgcn_layer(adj, nodes_pad, self.rgcn1_wT,
                                                       counts, row_tile=row_tile)
                nodes = nodes_pad[:bn]
            # TODO(synk): empty-edge batch falls back to raw embeddings (reference would error).

        _, tind = batch.target_indices(bind)
        subjects = jnp.asarray([t[0] for t in tind], dtype=jnp.int32)
        objects = jnp.asarray([t[1] for t in tind], dtype=jnp.int32)
        s = nodes[subjects, :]
        o = nodes[objects, :]
        p = self.relations[triples[:, 1], :]
        scores = distmult(s, p, o)
        return scores.reshape(dims)


# ----------------------------- demo -----------------------------

if __name__ == "__main__":
    n, r, emb, num_edges, ksample = 32, 4, 128, 64, 8

    key = jax.random.PRNGKey(0)
    kg, kd = jax.random.split(key)
    k_s, k_p, k_o = jax.random.split(kg, 3)
    src = np.asarray(jax.random.randint(k_s, (num_edges,), 0, n))
    rel = np.asarray(jax.random.randint(k_p, (num_edges,), 0, r))
    dst = np.asarray(jax.random.randint(k_o, (num_edges,), 0, n))
    graph_triples = [(int(s), int(p), int(o)) for s, p, o in zip(src, rel, dst)]

    model = SimpleLPPallas(graph_triples, n, r, emb=emb, ksample=ksample, seed=0)

    # full forward: query batch of 2 triples to score, shape (2, 3)
    query = jnp.asarray(graph_triples[:2], dtype=jnp.int32)
    scores = model.forward(query, depth=2)
    scores = jax.block_until_ready(scores)
    assert scores.shape == (2,) and scores.dtype == jnp.float32

    # exercise the tiled Pallas distmult decoder path (used for large score batches)
    kd1, kd2, kd3 = jax.random.split(kd, 3)
    S = jax.random.normal(kd1, (512, emb), jnp.float32)
    P = jax.random.normal(kd2, (512, emb), jnp.float32)
    O = jax.random.normal(kd3, (512, emb), jnp.float32)
    d_pl = jax.block_until_ready(distmult_pallas(S, P, O))
    d_ref = jnp.sum(S * P * O, axis=-1)
    np.testing.assert_allclose(np.asarray(d_pl), np.asarray(d_ref), rtol=1e-4, atol=1e-4)

    print("KERNEL_OK")
</pallas_src>

<mosaic_0001>
module attributes {stable_mosaic.version = 11 : i64} {
  func.func @_triple_score_kernel(%arg0: i32, %arg1: memref<32x128xbf16, #tpu.memory_space<vmem>>, %arg2: memref<32x128xbf16, #tpu.memory_space<vmem>>, %arg3: memref<32x128xbf16, #tpu.memory_space<vmem>>, %arg4: memref<128x128xbf16, #tpu.memory_space<vmem>>, %arg5: memref<1x128xf32, #tpu.memory_space<vmem>>, %arg6: memref<128x128xbf16, #tpu.memory_space<vmem>>, %arg7: memref<1x128xf32, #tpu.memory_space<vmem>>, %arg8: memref<32x1xf32, #tpu.memory_space<vmem>>) attributes {dimension_semantics = [#tpu.dimension_semantics<parallel>], iteration_bounds = array<i64: 1>, scalar_prefetch = 0 : i64, scratch_operands = 0 : i64, tpu.core_type = #tpu.core_type<tc>, window_params = [{transform_indices = @transform_0, window_bounds = array<i64: 32, 128>}, {transform_indices = @transform_1, window_bounds = array<i64: 32, 128>}, {transform_indices = @transform_2, window_bounds = array<i64: 32, 128>}, {pipeline_mode = #tpu.pipeline_mode<synchronous>, transform_indices = @transform_3, window_bounds = array<i64: 128, 128>}, {pipeline_mode = #tpu.pipeline_mode<synchronous>, transform_indices = @transform_4, window_bounds = array<i64: 1, 128>}, {pipeline_mode = #tpu.pipeline_mode<synchronous>, transform_indices = @transform_5, window_bounds = array<i64: 128, 128>}, {pipeline_mode = #tpu.pipeline_mode<synchronous>, transform_indices = @transform_6, window_bounds = array<i64: 1, 128>}, {transform_indices = @transform_7, window_bounds = array<i64: 32, 1>}]} {
    %c0 = arith.constant 0 : index
    %c0_0 = arith.constant 0 : index
    %0 = vector.load %arg1[%c0, %c0_0] : memref<32x128xbf16, #tpu.memory_space<vmem>>, vector<32x128xbf16>
    %c0_1 = arith.constant 0 : index
    %c0_2 = arith.constant 0 : index
    %1 = vector.load %arg4[%c0_1, %c0_2] : memref<128x128xbf16, #tpu.memory_space<vmem>>, vector<128x128xbf16>
    %cst = arith.constant dense<0.000000e+00> : vector<32x128xf32>
    %2 = tpu.matmul %0, %1, %cst {dimension_numbers = #tpu.dot_dimension_numbers<[1], [0], [0], [1], [0, 0, 1, 1], [], []>} : vector<32x128xbf16>, vector<128x128xbf16>, vector<32x128xf32> -> vector<32x128xf32>
    %c0_3 = arith.constant 0 : index
    %c0_4 = arith.constant 0 : index
    %3 = vector.load %arg5[%c0_3, %c0_4] : memref<1x128xf32, #tpu.memory_space<vmem>>, vector<1x128xf32>
    %4 = vector.broadcast %3 : vector<1x128xf32> to vector<32x128xf32>
    %5 = arith.addf %2, %4 : vector<32x128xf32>
    %c0_5 = arith.constant 0 : index
    %c0_6 = arith.constant 0 : index
    %6 = vector.load %arg3[%c0_5, %c0_6] : memref<32x128xbf16, #tpu.memory_space<vmem>>, vector<32x128xbf16>
    %c0_7 = arith.constant 0 : index
    %c0_8 = arith.constant 0 : index
    %7 = vector.load %arg6[%c0_7, %c0_8] : memref<128x128xbf16, #tpu.memory_space<vmem>>, vector<128x128xbf16>
    %cst_9 = arith.constant dense<0.000000e+00> : vector<32x128xf32>
    %8 = tpu.matmul %6, %7, %cst_9 {dimension_numbers = #tpu.dot_dimension_numbers<[1], [0], [0], [1], [0, 0, 1, 1], [], []>} : vector<32x128xbf16>, vector<128x128xbf16>, vector<32x128xf32> -> vector<32x128xf32>
    %c0_10 = arith.constant 0 : index
    %c0_11 = arith.constant 0 : index
    %9 = vector.load %arg7[%c0_10, %c0_11] : memref<1x128xf32, #tpu.memory_space<vmem>>, vector<1x128xf32>
    %10 = vector.broadcast %9 : vector<1x128xf32> to vector<32x128xf32>
    %11 = arith.addf %8, %10 : vector<32x128xf32>
    %c0_12 = arith.constant 0 : index
    %c0_13 = arith.constant 0 : index
    %12 = vector.load %arg2[%c0_12, %c0_13] : memref<32x128xbf16, #tpu.memory_space<vmem>>, vector<32x128xbf16>
    %13 = arith.extf %12 : vector<32x128xbf16> to vector<32x128xf32>
    %14 = arith.mulf %5, %13 : vector<32x128xf32>
    %15 = arith.mulf %14, %11 : vector<32x128xf32>
    %cst_14 = arith.constant dense<0.000000e+00> : vector<32xf32>
    %16 = vector.multi_reduction <add>, %15, %cst_14 [1] : vector<32x128xf32> to vector<32xf32>
    %17 = vector.shape_cast %16 : vector<32xf32> to vector<32x1xf32>
    %c0_15 = arith.constant 0 : index
    %c0_16 = arith.constant 0 : index
    %18 = vector.load %arg8[%c0_15, %c0_16] : memref<32x1xf32, #tpu.memory_space<vmem>>, vector<32x1xf32>
    tpu.vector_store %arg8[%c0_15, %c0_16], %17 {strides = array<i32>} : memref<32x1xf32, #tpu.memory_space<vmem>>, vector<32x1xf32>,
    return
  }
  func.func @transform_0(%arg0: i32) -> (i32, i32) {
    %c0_i32 = arith.constant 0 : i32
    %c0_i32_0 = arith.constant 0 : i32
    return %arg0, %c0_i32 : i32, i32
  }
  func.func @transform_1(%arg0: i32) -> (i32, i32) {
    %c0_i32 = arith.constant 0 : i32
    %c0_i32_0 = arith.constant 0 : i32
    return %arg0, %c0_i32 : i32, i32
  }
  func.func @transform_2(%arg0: i32) -> (i32, i32) {
    %c0_i32 = arith.constant 0 : i32
    %c0_i32_0 = arith.constant 0 : i32
    return %arg0, %c0_i32 : i32, i32
  }
  func.func @transform_3(%arg0: i32) -> (i32, i32) {
    %c0_i32 = arith.constant 0 : i32
    %c0_i32_0 = arith.constant 0 : i32
    %c0_i32_1 = arith.constant 0 : i32
    return %c0_i32, %c0_i32_0 : i32, i32
  }
  func.func @transform_4(%arg0: i32) -> (i32, i32) {
    %c0_i32 = arith.constant 0 : i32
    %c0_i32_0 = arith.constant 0 : i32
    %c0_i32_1 = arith.constant 0 : i32
    return %c0_i32, %c0_i32_0 : i32, i32
  }
  func.func @transform_5(%arg0: i32) -> (i32, i32) {
    %c0_i32 = arith.constant 0 : i32
    %c0_i32_0 = arith.constant 0 : i32
    %c0_i32_1 = arith.constant 0 : i32
    return %c0_i32, %c0_i32_0 : i32, i32
  }
  func.func @transform_6(%arg0: i32) -> (i32, i32) {
    %c0_i32 = arith.constant 0 : i32
    %c0_i32_0 = arith.constant 0 : i32
    %c0_i32_1 = arith.constant 0 : i32
    return %c0_i32, %c0_i32_0 : i32, i32
  }
  func.func @transform_7(%arg0: i32) -> (i32, i32) {
    %c0_i32 = arith.constant 0 : i32
    %c0_i32_0 = arith.constant 0 : i32
    return %arg0, %c0_i32 : i32, i32
  }
}

</mosaic_0001>

<llo_original>
// kernel: tpu_custom_call.1
$region0: #{tpu_custom_call.1}
  #allocation0 [shape = 'u32[]', space=smem, size = 0x4, offset = 0x4, fixed_abs, tag = 'smem constant byte address 0x4 - core index']
  #allocation1 [shape = 'u32[144,128]{1,0:T(1,128)}', space=vmem, size = 0x12000, scoped, tag = 'internal scratch']
  %s0 = inlined_call_operand.hbm [shape: bf16[32,128], index: 0, kind: input, shape index: {}]
  %s1 = inlined_call_operand.hbm [shape: bf16[32,128], index: 1, kind: input, shape index: {}]
  %s2 = inlined_call_operand.hbm [shape: bf16[32,128], index: 2, kind: input, shape index: {}]
  %s3 = inlined_call_operand.hbm [shape: bf16[128,128], index: 3, kind: input, shape index: {}]
  %s4 = inlined_call_operand.vmem [shape: f32[1,128], index: 4, kind: input, shape index: {}]
  %s5 = inlined_call_operand.hbm [shape: bf16[128,128], index: 5, kind: input, shape index: {}]
  %s6 = inlined_call_operand.vmem [shape: f32[1,128], index: 6, kind: input, shape index: {}]
  %s7 = inlined_call_operand.vmem [shape: f32[32,1], index: 7, kind: output, shape index: {}]
  %s8 = sld [smem:[#allocation0]]
  $region58: #{tpu_custom_call.1} parent=0
    _
  %s10 = ssub.s32 1, %s8
  %s11 = scalar_select 0, %s10, %s8
  $region1: #{tpu_custom_call.1} parent=0
    #allocation2 [shape = 'u8[8192]{0}', space=vmem, size = 0x2000, scoped, tag = 'input window, operand 0, single buffered']
    #allocation3 [shape = 's32[1]{0}', space=sflag, size = 0x4, scoped, tag = 'scoped memory for tpu_custom_call.1']
    #allocation4 [shape = 'u8[8192]{0}', space=vmem, size = 0x2000, scoped, tag = 'input window, operand 1, single buffered']
    #allocation5 [shape = 's32[1]{0}', space=sflag, size = 0x4, scoped, tag = 'scoped memory for tpu_custom_call.1']
    #allocation6 [shape = 'u8[8192]{0}', space=vmem, size = 0x2000, scoped, tag = 'input window, operand 2, single buffered']
    #allocation7 [shape = 'u8[32768]{0}', space=vmem, size = 0x8000, scoped, tag = 'input window, operand 3, single buffered']
    #allocation8 [shape = 's32[1]{0}', space=sflag, size = 0x4, scoped, tag = 'scoped memory for tpu_custom_call.1']
    #allocation9 [shape = 'u8[32768]{0}', space=vmem, size = 0x8000, scoped, tag = 'input window, operand 5, single buffered']
    %12 = vsyncpa [#allocation3], 0
    %13 = vsyncpa [#allocation5], 0
    %14 = vsyncpa [#allocation8], 0
    // Predicated region
    $region2: #{tpu_custom_call.1} parent=1 // pred_check
      _
    $region3: #{tpu_custom_call.1} parent=1 // pred_check_branch
      %16 = sbr.rel (0) target = $region5
    $region4: #{tpu_custom_call.1} parent=1 // pred_region
      %s18 = ssub.s32 256, 256
      %19 = vsyncadd [#allocation3], %s18
      %s20 = sshll.u32 [#allocation2], 4
      %s21 = int_to_ptr.vmem [resolvable:$true] %s20
      %26 = dma.hbm_to_vmem [thread:$0]  %s0, 256, %s21, [#allocation3], 64, 64, 4
    $region5: #{tpu_custom_call.1} parent=1 // pred_fallthru
      _
    // Predicated region
    $region6: #{tpu_custom_call.1} parent=1 // pred_check
      _
    $region7: #{tpu_custom_call.1} parent=1 // pred_check_branch
      %28 = sbr.rel (0) target = $region9
    $region8: #{tpu_custom_call.1} parent=1 // pred_region
      %s30 = ssub.s32 256, 256
      %31 = vsyncadd [#allocation5], %s30
      %s32 = sshll.u32 [#allocation4], 4
      %s33 = int_to_ptr.vmem [resolvable:$true] %s32
      %38 = dma.hbm_to_vmem [thread:$0]  %s1, 256, %s33, [#allocation5], 64, 64, 4
    $region9: #{tpu_custom_call.1} parent=1 // pred_fallthru
      _
    // Predicated region
    $region10: #{tpu_custom_call.1} parent=1 // pred_check
      _
    $region11: #{tpu_custom_call.1} parent=1 // pred_check_branch
      %40 = sbr.rel (0) target = $region13
    $region12: #{tpu_custom_call.1} parent=1 // pred_region
      %s42 = ssub.s32 256, 256
      %43 = vsyncadd [#allocation5], %s42
      %s44 = sshll.u32 [#allocation6], 4
      %s45 = int_to_ptr.vmem [resolvable:$true] %s44
      %50 = dma.hbm_to_vmem [thread:$0]  %s2, 256, %s45, [#allocation5], 64, 64, 4
    $region13: #{tpu_custom_call.1} parent=1 // pred_fallthru
      _
    // Predicated region
    $region14: #{tpu_custom_call.1} parent=1 // pred_check
      _
    $region15: #{tpu_custom_call.1} parent=1 // pred_check_branch
      %52 = sbr.rel (0) target = $region17
    $region16: #{tpu_custom_call.1} parent=1 // pred_region
      %s54 = ssub.s32 1024, 1024
      %55 = vsyncadd [#allocation8], %s54
      %s56 = sshll.u32 [#allocation7], 4
      %s57 = int_to_ptr.vmem [resolvable:$true] %s56
      %62 = dma.hbm_to_vmem [thread:$0]  %s3, 1024, %s57, [#allocation8], 64, 64, 4
    $region17: #{tpu_custom_call.1} parent=1 // pred_fallthru
      _
    // Predicated region
    $region18: #{tpu_custom_call.1} parent=1 // pred_check
      _
    $region19: #{tpu_custom_call.1} parent=1 // pred_check_branch
      %64 = sbr.rel (0) target = $region21
    $region20: #{tpu_custom_call.1} parent=1 // pred_region
      _
    $region21: #{tpu_custom_call.1} parent=1 // pred_fallthru
      _
    // Predicated region
    $region22: #{tpu_custom_call.1} parent=1 // pred_check
      _
    $region23: #{tpu_custom_call.1} parent=1 // pred_check_branch
      %66 = sbr.rel (0) target = $region25
    $region24: #{tpu_custom_call.1} parent=1 // pred_region
      %s68 = ssub.s32 1024, 1024
      %69 = vsyncadd [#allocation8], %s68
      %s70 = sshll.u32 [#allocation9], 4
      %s71 = int_to_ptr.vmem [resolvable:$true] %s70
      %76 = dma.hbm_to_vmem [thread:$0]  %s5, 1024, %s71, [#allocation8], 64, 64, 4
    $region25: #{tpu_custom_call.1} parent=1 // pred_fallthru
      _
    // Predicated region
    $region26: #{tpu_custom_call.1} parent=1 // pred_check
      _
    $region27: #{tpu_custom_call.1} parent=1 // pred_check_branch
      %78 = sbr.rel (0) target = $region29
    $region28: #{tpu_custom_call.1} parent=1 // pred_region
      _
    $region29: #{tpu_custom_call.1} parent=1 // pred_fallthru
      _
    // Predicated region
    $region30: #{tpu_custom_call.1} parent=1 // pred_check
      _
    $region31: #{tpu_custom_call.1} parent=1 // pred_check_branch
      %80 = sbr.rel (0) target = $region33
    $region32: #{tpu_custom_call.1} parent=1 // pred_region
      %81 = dma.done [#allocation3], 256
    $region33: #{tpu_custom_call.1} parent=1 // pred_fallthru
      _
    // Predicated region
    $region34: #{tpu_custom_call.1} parent=1 // pred_check
      _
    $region35: #{tpu_custom_call.1} parent=1 // pred_check_branch
      %83 = sbr.rel (0) target = $region37
    $region36: #{tpu_custom_call.1} parent=1 // pred_region
      %84 = dma.done [#allocation5], 256
    $region37: #{tpu_custom_call.1} parent=1 // pred_fallthru
      _
    // Predicated region
    $region38: #{tpu_custom_call.1} parent=1 // pred_check
      _
    $region39: #{tpu_custom_call.1} parent=1 // pred_check_branch
      %86 = sbr.rel (0) target = $region41
    $region40: #{tpu_custom_call.1} parent=1 // pred_region
      %87 = dma.done [#allocation5], 256
    $region41: #{tpu_custom_call.1} parent=1 // pred_fallthru
      _
    // Predicated region
    $region42: #{tpu_custom_call.1} parent=1 // pred_check
      _
    $region43: #{tpu_custom_call.1} parent=1 // pred_check_branch
      %89 = sbr.rel (0) target = $region45
    $region44: #{tpu_custom_call.1} parent=1 // pred_region
      %90 = dma.done [#allocation8], 1024
    $region45: #{tpu_custom_call.1} parent=1 // pred_fallthru
      _
    // Predicated region
    $region46: #{tpu_custom_call.1} parent=1 // pred_check
      _
    $region47: #{tpu_custom_call.1} parent=1 // pred_check_branch
      %92 = sbr.rel (0) target = $region49
    $region48: #{tpu_custom_call.1} parent=1 // pred_region
      %93 = dma.done [#allocation8], 1024
    $region49: #{tpu_custom_call.1} parent=1 // pred_fallthru
      _
    %v95 = vld [vmem:[#allocation2] sm:$0xf]
    %v96 = vld [vmem:[#allocation2 + $0x4] sm:$0xf]
    %v97 = vld [vmem:[#allocation2 + $0x8] sm:$0xf]
    %v98 = vld [vmem:[#allocation2 + $0xc] sm:$0xf]
    %v99 = vld [vmem:[#allocation7] sm:$0xf]
    %v100 = vld [vmem:[#allocation7 + $0x4] sm:$0xf]
    %v101 = vld [vmem:[#allocation7 + $0x8] sm:$0xf]
    %v102 = vld [vmem:[#allocation7 + $0xc] sm:$0xf]
    %v103 = vld [vmem:[#allocation7 + $0x10] sm:$0xf]
    %v104 = vld [vmem:[#allocation7 + $0x14] sm:$0xf]
    %v105 = vld [vmem:[#allocation7 + $0x18] sm:$0xf]
    %v106 = vld [vmem:[#allocation7 + $0x1c] sm:$0xf]
    %v107 = vld [vmem:[#allocation7 + $0x20] sm:$0xf]
    %v108 = vld [vmem:[#allocation7 + $0x24] sm:$0xf]
    %v109 = vld [vmem:[#allocation7 + $0x28] sm:$0xf]
    %v110 = vld [vmem:[#allocation7 + $0x2c] sm:$0xf]
    %v111 = vld [vmem:[#allocation7 + $0x30] sm:$0xf]
    %v112 = vld [vmem:[#allocation7 + $0x34] sm:$0xf]
    %v113 = vld [vmem:[#allocation7 + $0x38] sm:$0xf]
    %v114 = vld [vmem:[#allocation7 + $0x3c] sm:$0xf]
    %v115 = vld [vmem:[%s4] sm:$0x1]
    %v117 = vlaneseq
    %v118 = vshrl.u32 %v117, 7
    %v119 = vsub.s32 0, %v118
    %v120 = vrot.slane %v115, %v119
    %v126 = vunpack.c.l.b16 %v95
    %v127 = vunpack.c.l.b16 %v96
    %v128 = vunpack.c.l.b16 %v97
    %v129 = vunpack.c.l.b16 %v98
    %v130 = vpack.c.b16 %v127, %v126
    %v131 = vpack.c.b16 %v129, %v128
    %v150 = vunpack.c.l.b16 %v99
    %v151 = vunpack.c.l.b16 %v100
    %v152 = vunpack.c.l.b16 %v101
    %v153 = vunpack.c.l.b16 %v102
    %v154 = vunpack.c.l.b16 %v103
    %v155 = vunpack.c.l.b16 %v104
    %v156 = vunpack.c.l.b16 %v105
    %v157 = vunpack.c.l.b16 %v106
    %v158 = vunpack.c.l.b16 %v107
    %v159 = vunpack.c.l.b16 %v108
    %v160 = vunpack.c.l.b16 %v109
    %v161 = vunpack.c.l.b16 %v110
    %v162 = vunpack.c.l.b16 %v111
    %v163 = vunpack.c.l.b16 %v112
    %v164 = vunpack.c.l.b16 %v113
    %v165 = vunpack.c.l.b16 %v114
    %v166 = vpack.c.b16 %v151, %v150
    %v167 = vpack.c.b16 %v153, %v152
    %v168 = vpack.c.b16 %v155, %v154
    %v169 = vpack.c.b16 %v157, %v156
    %v170 = vpack.c.b16 %v159, %v158
    %v171 = vpack.c.b16 %v161, %v160
    %v172 = vpack.c.b16 %v163, %v162
    %v173 = vpack.c.b16 %v165, %v164
    %182 = vmatprep.subr.bf16.mxu0 0
    %183 = vmatpush1.bf16.msra.mxu0 %v166
    %184 = vmatprep.subr.bf16.mxu0 0
    %185 = vmatpush1.bf16.msra.mxu0 %v167
    %186 = vmatprep.subr.bf16.mxu0 0
    %187 = vmatpush1.bf16.msra.mxu0 %v168
    %188 = vmatprep.subr.bf16.mxu0 0
    %189 = vmatpush1.bf16.msra.mxu0 %v169
    %190 = vmatprep.subr.bf16.mxu0 0
    %191 = vmatpush1.bf16.msra.mxu0 %v170
    %192 = vmatprep.subr.bf16.mxu0 0
    %193 = vmatpush1.bf16.msra.mxu0 %v171
    %194 = vmatprep.subr.bf16.mxu0 0
    %195 = vmatpush1.bf16.msra.mxu0 %v172
    %196 = vmatprep.subr.bf16.mxu0 0
    %197 = vmatpush1.bf16.msra.mxu0 %v173
    %198 = vmatprep.subr.bf16.mxu0 0
    %199 = vmatpush1.bf16.msra.mxu0 0
    %200 = vmatprep.subr.bf16.mxu0 0
    %201 = vmatpush1.bf16.msra.mxu0 0
    %202 = vmatprep.subr.bf16.mxu0 0
    %203 = vmatpush1.bf16.msra.mxu0 0
    %204 = vmatprep.subr.bf16.mxu0 0
    %205 = vmatpush1.bf16.msra.mxu0 0
    %206 = vmatprep.subr.bf16.mxu0 0
    %207 = vmatpush1.bf16.msra.mxu0 0
    %208 = vmatprep.subr.bf16.mxu0 0
    %209 = vmatpush1.bf16.msra.mxu0 0
    %210 = vmatprep.subr.bf16.mxu0 0
    %211 = vmatpush1.bf16.msra.mxu0 0
    %212 = vmatprep.subr.bf16.mxu0 0
    %213 = vmatpush1.bf16.msra.mxu0 0
    %214 = vmatprep.mubr.bf16.mxu0 0
    %215 = vmatmul.mubr.bf16.gmra.mrb[0].mxu0 %v130
    %v216 = vpop.f32.mrb[0].mxu0
    %v217 = vadd.f32 %v120, %v216
    %v218 = vpop.f32.mrb[0].mxu0
    %v219 = vpop.f32.mrb[0].mxu0
    %v220 = vadd.f32 %v120, %v219
    %v221 = vpop.f32.mrb[0].mxu0
    %222 = vmatprep.mubr.bf16.mxu0 0
    %223 = vmatmul.mubr.bf16.gmra.mrb[0].mxu0 %v131
    %v224 = vpop.f32.mrb[0].mxu0
    %v225 = vadd.f32 %v120, %v224
    %v226 = vpop.f32.mrb[0].mxu0
    %v227 = vpop.f32.mrb[0].mxu0
    %v228 = vadd.f32 %v120, %v227
    %v229 = vpop.f32.mrb[0].mxu0
    %230 = vdwg.mxu0
    %v231 = vld [vmem:[#allocation6] sm:$0xf]
    %v232 = vld [vmem:[#allocation6 + $0x4] sm:$0xf]
    %v233 = vld [vmem:[#allocation6 + $0x8] sm:$0xf]
    %v234 = vld [vmem:[#allocation6 + $0xc] sm:$0xf]
    %v235 = vld [vmem:[#allocation9] sm:$0xf]
    %v236 = vld [vmem:[#allocation9 + $0x4] sm:$0xf]
    %v237 = vld [vmem:[#allocation9 + $0x8] sm:$0xf]
    %v238 = vld [vmem:[#allocation9 + $0xc] sm:$0xf]
    %v239 = vld [vmem:[#allocation9 + $0x10] sm:$0xf]
    %v240 = vld [vmem:[#allocation9 + $0x14] sm:$0xf]
    %v241 = vld [vmem:[#allocation9 + $0x18] sm:$0xf]
    %v242 = vld [vmem:[#allocation9 + $0x1c] sm:$0xf]
    %v243 = vld [vmem:[#allocation9 + $0x20] sm:$0xf]
    %v244 = vld [vmem:[#allocation9 + $0x24] sm:$0xf]
    %v245 = vld [vmem:[#allocation9 + $0x28] sm:$0xf]
    %v246 = vld [vmem:[#allocation9 + $0x2c] sm:$0xf]
    %v247 = vld [vmem:[#allocation9 + $0x30] sm:$0xf]
    %v248 = vld [vmem:[#allocation9 + $0x34] sm:$0xf]
    %v249 = vld [vmem:[#allocation9 + $0x38] sm:$0xf]
    %v250 = vld [vmem:[#allocation9 + $0x3c] sm:$0xf]
    %v251 = vld [vmem:[%s6] sm:$0x1]
    %v253 = vlaneseq
    %v254 = vshrl.u32 %v253, 7
    %v255 = vsub.s32 0, %v254
    %v256 = vrot.slane %v251, %v255
    %v262 = vunpack.c.l.b16 %v231
    %v263 = vunpack.c.l.b16 %v232
    %v264 = vunpack.c.l.b16 %v233
    %v265 = vunpack.c.l.b16 %v234
    %v266 = vpack.c.b16 %v263, %v262
    %v267 = vpack.c.b16 %v265, %v264
    %v286 = vunpack.c.l.b16 %v235
    %v287 = vunpack.c.l.b16 %v236
    %v288 = vunpack.c.l.b16 %v237
    %v289 = vunpack.c.l.b16 %v238
    %v290 = vunpack.c.l.b16 %v239
    %v291 = vunpack.c.l.b16 %v240
    %v292 = vunpack.c.l.b16 %v241
    %v293 = vunpack.c.l.b16 %v242
    %v294 = vunpack.c.l.b16 %v243
    %v295 = vunpack.c.l.b16 %v244
    %v296 = vunpack.c.l.b16 %v245
    %v297 = vunpack.c.l.b16 %v246
    %v298 = vunpack.c.l.b16 %v247
    %v299 = vunpack.c.l.b16 %v248
    %v300 = vunpack.c.l.b16 %v249
    %v301 = vunpack.c.l.b16 %v250
    %v302 = vpack.c.b16 %v287, %v286
    %v303 = vpack.c.b16 %v289, %v288
    %v304 = vpack.c.b16 %v291, %v290
    %v305 = vpack.c.b16 %v293, %v292
    %v306 = vpack.c.b16 %v295, %v294
    %v307 = vpack.c.b16 %v297, %v296
    %v308 = vpack.c.b16 %v299, %v298
    %v309 = vpack.c.b16 %v301, %v300
    %318 = vmatprep.subr.bf16.mxu0 0
    %319 = vmatpush1.bf16.msra.mxu0 %v302
    %320 = vmatprep.subr.bf16.mxu0 0
    %321 = vmatpush1.bf16.msra.mxu0 %v303
    %322 = vmatprep.subr.bf16.mxu0 0
    %323 = vmatpush1.bf16.msra.mxu0 %v304
    %324 = vmatprep.subr.bf16.mxu0 0
    %325 = vmatpush1.bf16.msra.mxu0 %v305
    %326 = vmatprep.subr.bf16.mxu0 0
    %327 = vmatpush1.bf16.msra.mxu0 %v306
    %328 = vmatprep.subr.bf16.mxu0 0
    %329 = vmatpush1.bf16.msra.mxu0 %v307
    %330 = vmatprep.subr.bf16.mxu0 0
    %331 = vmatpush1.bf16.msra.mxu0 %v308
    %332 = vmatprep.subr.bf16.mxu0 0
    %333 = vmatpush1.bf16.msra.mxu0 %v309
    %334 = vmatprep.subr.bf16.mxu0 0
    %335 = vmatpush1.bf16.msra.mxu0 0
    %336 = vmatprep.subr.bf16.mxu0 0
    %337 = vmatpush1.bf16.msra.mxu0 0
    %338 = vmatprep.subr.bf16.mxu0 0
    %339 = vmatpush1.bf16.msra.mxu0 0
    %340 = vmatprep.subr.bf16.mxu0 0
    %341 = vmatpush1.bf16.msra.mxu0 0
    %342 = vmatprep.subr.bf16.mxu0 0
    %343 = vmatpush1.bf16.msra.mxu0 0
    %344 = vmatprep.subr.bf16.mxu0 0
    %345 = vmatpush1.bf16.msra.mxu0 0
    %346 = vmatprep.subr.bf16.mxu0 0
    %347 = vmatpush1.bf16.msra.mxu0 0
    %348 = vmatprep.subr.bf16.mxu0 0
    %349 = vmatpush1.bf16.msra.mxu0 0
    %350 = vmatprep.mubr.bf16.mxu0 0
    %351 = vmatmul.mubr.bf16.gmra.mrb[0].mxu0 %v266
    %v352 = vpop.f32.mrb[0].mxu0
    %v353 = vadd.f32 %v256, %v352
    %v354 = vpop.f32.mrb[0].mxu0
    %v355 = vpop.f32.mrb[0].mxu0
    %v356 = vadd.f32 %v256, %v355
    %v357 = vpop.f32.mrb[0].mxu0
    %358 = vmatprep.mubr.bf16.mxu0 0
    %359 = vmatmul.mubr.bf16.gmra.mrb[0].mxu0 %v267
    %v360 = vpop.f32.mrb[0].mxu0
    %v361 = vadd.f32 %v256, %v360
    %v362 = vpop.f32.mrb[0].mxu0
    %v363 = vpop.f32.mrb[0].mxu0
    %v364 = vadd.f32 %v256, %v363
    %v365 = vpop.f32.mrb[0].mxu0
    %366 = vdwg.mxu0
    %v367 = vld [vmem:[#allocation4] sm:$0xf]
    %v368 = vld [vmem:[#allocation4 + $0x4] sm:$0xf]
    %v369 = vld [vmem:[#allocation4 + $0x8] sm:$0xf]
    %v370 = vld [vmem:[#allocation4 + $0xc] sm:$0xf]
    %v371 = vunpack.c.l.bf16 %v367
    %v372 = vunpack.c.l.bf16 %v368
    %v373 = vunpack.c.l.bf16 %v369
    %v374 = vunpack.c.l.bf16 %v370
    %v375 = vmul.f32 %v217, %v371
    %v376 = vmul.f32 %v220, %v372
    %v377 = vmul.f32 %v225, %v373
    %v378 = vmul.f32 %v228, %v374
    %v379 = vmul.f32 %v375, %v353
    %v380 = vmul.f32 %v376, %v356
    %v381 = vmul.f32 %v377, %v361
    %v382 = vmul.f32 %v378, %v364
    %383 = vadd.xlane.f32.xlu0 %v379
    %v384 = vpop.xlane.xlu0 %383
    %385 = vadd.xlane.f32.xlu0 %v380
    %v386 = vpop.xlane.xlu0 %385
    %387 = vadd.xlane.f32.xlu0 %v381
    %v388 = vpop.xlane.xlu0 %387
    %389 = vadd.xlane.f32.xlu0 %v382
    %v390 = vpop.xlane.xlu0 %389
    %vm391 = vcmask 7168
    %392 = vst.msk [vmem:[%s7] sm:$0xff] %vm391, %v384
    %393 = vst.msk [vmem:[%s7 + $0x8] sm:$0xff] %vm391, %v386
    %394 = vst.msk [vmem:[%s7 + $0x10] sm:$0xff] %vm391, %v388
    %395 = vst.msk [vmem:[%s7 + $0x18] sm:$0xff] %vm391, %v390
    // Predicated region
    $region50: #{tpu_custom_call.1} parent=1 // pred_check
      _
    $region51: #{tpu_custom_call.1} parent=1 // pred_check_branch
      %397 = sbr.rel (0) target = $region53
    $region52: #{tpu_custom_call.1} parent=1 // pred_region
      _
    $region53: #{tpu_custom_call.1} parent=1 // pred_fallthru
      _
    // Predicated region
    $region54: #{tpu_custom_call.1} parent=1 // pred_check
      _
    $region55: #{tpu_custom_call.1} parent=1 // pred_check_branch
      %399 = sbr.rel (0) target = $region57
    $region56: #{tpu_custom_call.1} parent=1 // pred_region
      _
    $region57: #{tpu_custom_call.1} parent=1 // pred_fallthru
      _
    %400 = vsyncpa [#allocation3], 1
    %401 = vsyncpa [#allocation5], 1
    %402 = vsyncpa [#allocation8], 1

</llo_original>
